<compile_context>
chip_gen: v5e
topology: v5e:2x2
jax: 0.10.0
libtpu: 0.0.40
codegen_flags: <defaults>
</compile_context>

<pallas_src>
import functools

import jax
import jax.numpy as jnp
from jax import lax
from jax.experimental import pallas as pl
from jax.experimental.pallas import tpu as pltpu


def _keep_threshold(keep_prob: float) -> int:
    # Signed-safe threshold on the top 31 bits of the hash.
    return min((1 << 31) - 1, max(1, int(round(keep_prob * float(1 << 31)))))


def _dropout_kernel(seed_ref, x_ref, o_ref, *, keep_prob: float,
                    cols_shift: int, block_elems: int):
    shape = x_ref.shape

    # Global flat element index of every lane in this block (independent of the
    # tiling so the mask is reproducible for a given seed).
    base = pl.program_id(0).astype(jnp.uint32) * jnp.uint32(block_elems)
    row = lax.broadcasted_iota(jnp.int32, shape, 0).astype(jnp.uint32)
    col = lax.broadcasted_iota(jnp.int32, shape, 1).astype(jnp.uint32)
    idx = base + (row << cols_shift) + col

    # Counter-based PRNG: scalar seed mix + lowbias32-style mixer (two
    # per-element u32 multiplies; the final xor-fold is dropped because it
    # never affects the high bits used by the threshold compare).
    seed_mix = seed_ref[0].astype(jnp.uint32) * jnp.uint32(0x9E3779B1)  # scalar
    h = idx ^ seed_mix
    h = h ^ (h >> 16)
    h = h * jnp.uint32(0x7FEB352D)
    h = h ^ (h >> 15)
    h = h * jnp.uint32(0x846CA68B)

    thresh = jnp.int32(_keep_threshold(keep_prob))
    keep = (h >> 1).astype(jnp.int32) < thresh  # signed-safe, 31 random bits

    # Scale in f32 so 1/keep_prob is exact even for bf16/fp16 inputs
    # (no-op casts for f32 inputs).
    xv = x_ref[...]
    scaled = (xv.astype(jnp.float32) * jnp.float32(1.0 / keep_prob)).astype(xv.dtype)
    o_ref[...] = jnp.where(keep, scaled, jnp.zeros_like(scaled))


def _keep_mask_jax(idx_u32, seed_u32, keep_prob: float):
    """Plain-JAX mirror of the in-kernel hash (used for the < 1-block tail)."""
    h = idx_u32 ^ (seed_u32 * jnp.uint32(0x9E3779B1))
    h = h ^ (h >> 16)
    h = h * jnp.uint32(0x7FEB352D)
    h = h ^ (h >> 15)
    h = h * jnp.uint32(0x846CA68B)
    return (h >> 1).astype(jnp.int32) < jnp.int32(_keep_threshold(keep_prob))


def _choose_tile_rows(rows: int, cols: int, sub: int, itemsize: int) -> int:
    # ~4 MiB per block -> in + out, double-buffered ~16 MiB VMEM.
    target = max(sub, ((4 << 20) // itemsize) // cols)
    if rows >= 2 * sub:
        # Ensure >= 2 grid steps so the parallel axis can shard across both
        # TensorCores on v7x.
        target = min(target, rows // 2)
    tile = max(sub, (min(rows, target) // sub) * sub)
    while rows % tile:  # keep blocks exactly dividing the slab (no ragged tile)
        tile -= sub
    return tile


def _dropout_2d(x2d, seed_arr, p: float, tile_rows: int):
    rows, cols = x2d.shape
    grid = (rows // tile_rows,)
    kernel = functools.partial(
        _dropout_kernel,
        keep_prob=1.0 - p,
        cols_shift=cols.bit_length() - 1,  # cols is a power of two
        block_elems=tile_rows * cols,
    )
    nbytes = rows * cols * x2d.dtype.itemsize
    return pl.pallas_call(
        kernel,
        out_shape=jax.ShapeDtypeStruct((rows, cols), x2d.dtype),
        grid_spec=pltpu.PrefetchScalarGridSpec(
            num_scalar_prefetch=1,
            grid=grid,
            in_specs=[pl.BlockSpec((tile_rows, cols), lambda i, seed: (i, 0))],
            out_specs=pl.BlockSpec((tile_rows, cols), lambda i, seed: (i, 0)),
        ),
        compiler_params=pltpu.CompilerParams(
            dimension_semantics=("parallel",),   # independent blocks
            vmem_limit_bytes=32 << 20,           # 4 MiB blocks x 4 buffers fits
        ),
        cost_estimate=pl.CostEstimate(
            flops=2 * rows * cols, transcendentals=0, bytes_accessed=2 * nbytes),
    )(seed_arr, x2d)


@functools.partial(jax.jit, static_argnames=("p",))
def _dropout_apply(x, seed_arr, p: float):
    orig_shape = x.shape
    dtype = x.dtype
    n = x.size
    if n == 0:
        return x
    if n >= (1 << 32):
        raise ValueError("CustomDropout: tensors with >= 2**32 elements would wrap the u32 mask index.")

    keep_prob = 1.0 - p
    itemsize = dtype.itemsize
    sub = {4: 8, 2: 16, 1: 32}.get(itemsize, 8)  # native sublane tile per dtype
    flat = x.reshape(-1)
    seed_u = seed_arr[0].astype(jnp.uint32)

    # Widest lane-dense slab that the element count supports.
    cols = None
    for c in (1024, 512, 256, 128):
        if n >= sub * c:
            cols = c
            break

    parts = []
    n_bulk = 0
    if cols is not None:
        n_bulk = (n // (sub * cols)) * (sub * cols)
        rows = n_bulk // cols
        tile_rows = _choose_tile_rows(rows, cols, sub, itemsize)
        x2d = (flat if n_bulk == n else flat[:n_bulk]).reshape(rows, cols)
        y2d = _dropout_2d(x2d, seed_arr, p, tile_rows)
        parts.append(y2d.reshape(-1))

    if n_bulk < n:
        # Tiny (< sub*cols elements) remainder: same hash, plain JAX.
        tail_x = flat[n_bulk:]
        tail_idx = jnp.arange(n - n_bulk, dtype=jnp.uint32) + jnp.uint32(n_bulk)
        keep = _keep_mask_jax(tail_idx, seed_u, keep_prob)
        tail_scaled = (tail_x.astype(jnp.float32)
                       * jnp.float32(1.0 / keep_prob)).astype(dtype)
        parts.append(jnp.where(keep, tail_scaled, jnp.zeros_like(tail_scaled)))

    y = parts[0] if len(parts) == 1 else jnp.concatenate(parts)
    return y.reshape(orig_shape)


class CustomDropout:
    """JAX/Pallas port of the PyTorch CustomDropout (inverted dropout).

    - training=True  : x * mask, mask ~ Bernoulli(1-p) / (1-p)
    - training=False : identity
    - repeat_mask_flag semantics are obtained by reusing the same seed
      (the mask is a deterministic function of the seed and element index).
    """

    def __init__(self, p: float = 0.5):
        assert 0.0 < p < 1.0, "Dropout probability out of range (0 < p < 1)"
        self.p = p
        self.training = True
        self.repeat_mask_flag = False
        self._frozen_seed = None
        self._auto_seed = 0

    def __call__(self, x, seed=None):
        if not self.training:
            return x

        if self.repeat_mask_flag and self._frozen_seed is not None:
            use_seed = self._frozen_seed
        else:
            if seed is None:
                seed = self._auto_seed
                self._auto_seed += 1
            use_seed = int(seed) & 0x7FFFFFFF
            self._frozen_seed = use_seed

        seed_arr = jnp.array([use_seed], dtype=jnp.int32)
        return _dropout_apply(x, seed_arr, self.p)


def _check_inverted_dropout(x, y, p, tol=1e-5):
    scale = 1.0 / (1.0 - p)
    mask_vals = jnp.where(x != 0, y / jnp.where(x == 0, 1.0, x), 0.0)
    kept = jnp.abs(mask_vals - scale) < tol
    dropped = jnp.abs(mask_vals) < tol
    assert bool(jnp.all(kept | dropped))
    return float(jnp.mean(kept.astype(jnp.float32)))


if __name__ == "__main__":
    key = jax.random.PRNGKey(0)
    k1, k2, k3 = jax.random.split(key, 3)

    # NCHW input, as the PyTorch module would see from a conv stack.
    x = jax.random.normal(k1, (2, 4, 16, 16), dtype=jnp.float32)

    drop = CustomDropout(p=0.5)

    # Training path (Pallas kernel, fully aligned -> no tail).
    y_train = jax.block_until_ready(drop(x, seed=123))

    # Frozen-mask path: same seed reused -> identical mask.
    drop.repeat_mask_flag = True
    y_repeat = jax.block_until_ready(drop(x, seed=999))  # seed ignored, frozen
    assert jnp.array_equal(y_train, y_repeat)
    drop.repeat_mask_flag = False

    # Surviving elements scaled by exactly 1/(1-p); keep fraction ~ 1-p.
    keep_frac = _check_inverted_dropout(x, y_train, 0.5)
    assert 0.3 < keep_frac < 0.7

    # Unaligned size: Pallas kernel on the aligned bulk + plain-JAX tail.
    x_odd = jax.random.normal(k2, (2, 600), dtype=jnp.float32)
    y_odd = jax.block_until_ready(drop(x_odd, seed=7))
    assert y_odd.shape == x_odd.shape
    _check_inverted_dropout(x_odd, y_odd, 0.5)

    # Tiny tensor (below one block): pure epilogue path.
    x_tiny = jax.random.normal(k3, (3, 5, 7), dtype=jnp.float32)
    y_tiny = jax.block_until_ready(drop(x_tiny, seed=11))
    assert y_tiny.shape == x_tiny.shape
    _check_inverted_dropout(x_tiny, y_tiny, 0.5)

    # Eval path: identity.
    drop.training = False
    y_eval = jax.block_until_ready(drop(x))
    assert jnp.array_equal(y_eval, x)

    print("KERNEL_OK")
</pallas_src>

<mosaic_0001>
module attributes {stable_mosaic.version = 11 : i64} {
  func.func @_dropout_kernel(%arg0: i32, %arg1: memref<1xi32, #tpu.memory_space<smem>>, %arg2: memref<8x256xf32, #tpu.memory_space<vmem>>, %arg3: memref<8x256xf32, #tpu.memory_space<vmem>>) attributes {dimension_semantics = [#tpu.dimension_semantics<parallel>], iteration_bounds = array<i64: 1>, scalar_prefetch = 1 : i64, scratch_operands = 0 : i64, tpu.core_type = #tpu.core_type<tc>, window_params = [{transform_indices = @transform_0, window_bounds = array<i64: 8, 256>}, {transform_indices = @transform_1, window_bounds = array<i64: 8, 256>}]} {
    %c2048_i32 = arith.constant 2048 : i32
    %0 = arith.muli %arg0, %c2048_i32 : i32
    %1 = tpu.iota {dimensions = array<i32: 0>} : vector<8x256xi32>
    %2 = tpu.iota {dimensions = array<i32: 1>} : vector<8x256xi32>
    %c8_i32 = arith.constant 8 : i32
    %3 = vector.broadcast %c8_i32 : i32 to vector<8x256xi32>
    %4 = arith.shli %1, %3 : vector<8x256xi32>
    %5 = vector.broadcast %0 : i32 to vector<8x256xi32>
    %6 = arith.addi %5, %4 : vector<8x256xi32>
    %7 = arith.addi %6, %2 : vector<8x256xi32>
    %c0 = arith.constant 0 : index
    %8 = memref.load %arg1[%c0] : memref<1xi32, #tpu.memory_space<smem>>
    %c-1640531535_i32 = arith.constant -1640531535 : i32
    %9 = arith.muli %8, %c-1640531535_i32 : i32
    %10 = vector.broadcast %9 : i32 to vector<8x256xi32>
    %11 = arith.xori %7, %10 : vector<8x256xi32>
    %c16_i32 = arith.constant 16 : i32
    %12 = vector.broadcast %c16_i32 : i32 to vector<8x256xi32>
    %13 = arith.shrui %11, %12 : vector<8x256xi32>
    %14 = arith.xori %11, %13 : vector<8x256xi32>
    %c2146121005_i32 = arith.constant 2146121005 : i32
    %15 = vector.broadcast %c2146121005_i32 : i32 to vector<8x256xi32>
    %16 = arith.muli %14, %15 : vector<8x256xi32>
    %c15_i32 = arith.constant 15 : i32
    %17 = vector.broadcast %c15_i32 : i32 to vector<8x256xi32>
    %18 = arith.shrui %16, %17 : vector<8x256xi32>
    %19 = arith.xori %16, %18 : vector<8x256xi32>
    %c-2073254261_i32 = arith.constant -2073254261 : i32
    %20 = vector.broadcast %c-2073254261_i32 : i32 to vector<8x256xi32>
    %21 = arith.muli %19, %20 : vector<8x256xi32>
    %c1_i32 = arith.constant 1 : i32
    %22 = vector.broadcast %c1_i32 : i32 to vector<8x256xi32>
    %23 = arith.shrui %21, %22 : vector<8x256xi32>
    %c1073741824_i32 = arith.constant 1073741824 : i32
    %24 = vector.broadcast %c1073741824_i32 : i32 to vector<8x256xi32>
    %25 = arith.cmpi slt, %23, %24 : vector<8x256xi32>
    %c0_0 = arith.constant 0 : index
    %c0_1 = arith.constant 0 : index
    %26 = vector.load %arg2[%c0_0, %c0_1] : memref<8x256xf32, #tpu.memory_space<vmem>>, vector<8x256xf32>
    %cst = arith.constant 2.000000e+00 : f32
    %27 = vector.broadcast %cst : f32 to vector<8x256xf32>
    %28 = arith.mulf %26, %27 : vector<8x256xf32>
    %cst_2 = arith.constant 0.000000e+00 : f32
    %29 = vector.broadcast %cst_2 : f32 to vector<8x256xf32>
    %30 = arith.select %25, %28, %29 : vector<8x256xi1>, vector<8x256xf32>
    %c0_3 = arith.constant 0 : index
    %c0_4 = arith.constant 0 : index
    %31 = vector.load %arg3[%c0_3, %c0_4] : memref<8x256xf32, #tpu.memory_space<vmem>>, vector<8x256xf32>
    tpu.vector_store %arg3[%c0_3, %c0_4], %30 {strides = array<i32>} : memref<8x256xf32, #tpu.memory_space<vmem>>, vector<8x256xf32>,
    return
  }
  func.func @transform_0(%arg0: i32, %arg1: memref<1xi32, #tpu.memory_space<smem>>) -> (i32, i32) {
    %c0_i32 = arith.constant 0 : i32
    %c0_i32_0 = arith.constant 0 : i32
    return %arg0, %c0_i32 : i32, i32
  }
  func.func @transform_1(%arg0: i32, %arg1: memref<1xi32, #tpu.memory_space<smem>>) -> (i32, i32) {
    %c0_i32 = arith.constant 0 : i32
    %c0_i32_0 = arith.constant 0 : i32
    return %arg0, %c0_i32 : i32, i32
  }
}

</mosaic_0001>

<llo_original>
// kernel: _dropout_apply.1
$region0: #{_dropout_apply.1}
  #allocation0 [shape = 'u32[]', space=smem, size = 0x4, offset = 0x4, fixed_abs, tag = 'smem constant byte address 0x4 - core index']
  #allocation1 [shape = 'u32[72,128]{1,0:T(1,128)}', space=vmem, size = 0x9000, scoped, tag = 'internal scratch']
  #allocation2 [shape = 's32[1]{0}', space=sflag, size = 0x4, scoped, tag = 'scoped memory for _dropout_apply.1']
  #allocation3 [shape = 's32[1]{0:T(128)S(6)}', space=smem, size = 0x200, scoped, tag = 'prefetched SMEM operand 0']
  %s0 = inlined_call_operand.<no memory space> [shape: s32[1], index: 0, kind: input, shape index: {}]
  %s1 = inlined_call_operand.vmem [shape: f32[8,256], index: 1, kind: input, shape index: {}]
  %s2 = inlined_call_operand.vmem [shape: f32[8,256], index: 2, kind: output, shape index: {}]
  %s3 = sld [smem:[#allocation0]]
  $region14: #{_dropout_apply.1} parent=0
    _
  %s5 = ssub.s32 1, %s3
  %s6 = scalar_select 0, %s5, %s3
  %7 = sst [smem:[#allocation3]] %s0
  // Predicated region
  $region2: #{_dropout_apply.1} parent=0 // pred_check
    _
  $region3: #{_dropout_apply.1} parent=0 // pred_check_branch
    %9 = sbr.rel (0) target = $region5
  $region4: #{_dropout_apply.1} parent=0 // pred_region
    _
  $region5: #{_dropout_apply.1} parent=0 // pred_fallthru
    _
  %s10 = smul.u32 0, 2048
  %v11 = vlaneseq
  %v12 = vshrl.u32 %v11, 7
  %v13 = vlaneseq
  %v14 = vand.u32 %v13, 127
  %v15 = vadd.s32 %v14, 128
  %v16 = vshll.u32 %v12, 8
  %v17 = vstv %s10
  %v18 = vadd.s32 %v17, %v16
  %v19 = vadd.s32 %v18, %v14
  %v20 = vadd.s32 %v18, %v15
  %s21 = sld [smem:[#allocation3]]
  %s22 = smul.u32 %s21, 2654435761
  %v23 = vstv %s22
  %v24 = vxor.u32 %v19, %v23
  %v25 = vxor.u32 %v20, %v23
  %v26 = vshrl.u32 %v24, 16
  %v27 = vshrl.u32 %v25, 16
  %v28 = vxor.u32 %v24, %v26
  %v29 = vxor.u32 %v25, %v27
  %v30 = vmul.u32 %v28, 2146121005
  %v31 = vmul.u32 %v29, 2146121005
  %v32 = vshrl.u32 %v30, 15
  %v33 = vshrl.u32 %v31, 15
  %v34 = vxor.u32 %v30, %v32
  %v35 = vxor.u32 %v31, %v33
  %v36 = vmul.u32 %v34, 2221713035
  %v37 = vmul.u32 %v35, 2221713035
  %v38 = vshrl.u32 %v36, 1
  %v39 = vshrl.u32 %v37, 1
  %vm40 = vcmp.lt.s32.totalorder %v38, 1073741824
  %vm41 = vcmp.lt.s32.totalorder %v39, 1073741824
  %v42 = vld [vmem:[%s1] sm:$0xff]
  %v43 = vld [vmem:[%s1 + $0x8] sm:$0xff]
  %v44 = vmul.f32 %v42, 2.0
  %v45 = vmul.f32 %v43, 2.0
  %v46 = vsel %vm40, %v44, 0.0
  %v47 = vsel %vm41, %v45, 0.0
  %48 = vst [vmem:[%s2] sm:$0xff] %v46
  %49 = vst [vmem:[%s2 + $0x8] sm:$0xff] %v47
  // Predicated region
  $region6: #{_dropout_apply.1} parent=0 // pred_check
    _
  $region7: #{_dropout_apply.1} parent=0 // pred_check_branch
    %51 = sbr.rel (0) target = $region9
  $region8: #{_dropout_apply.1} parent=0 // pred_region
    _
  $region9: #{_dropout_apply.1} parent=0 // pred_fallthru
    _
  // Predicated region
  $region10: #{_dropout_apply.1} parent=0 // pred_check
    _
  $region11: #{_dropout_apply.1} parent=0 // pred_check_branch
    %53 = sbr.rel (0) target = $region13
  $region12: #{_dropout_apply.1} parent=0 // pred_region
    _
  $region13: #{_dropout_apply.1} parent=0 // pred_fallthru
    _

</llo_original>
